<compile_context>
chip_gen: v6e
topology: v6e:2x2x1
jax: 0.10.0
libtpu: 0.0.40
codegen_flags: <defaults>
</compile_context>

<pallas_src>
import functools

import jax
import jax.numpy as jnp
from jax.experimental import pallas as pl
from jax.experimental.pallas import tpu as pltpu

GROUP = 8                 # batch rows packed per lane-dense row (8 sublanes -> lanes)
ROW_ALIGN = 8 * GROUP     # tile/batch padding granularity (keeps sublanes % 8 == 0)


def _round_up(x, m):
    return (x + m - 1) // m * m


def _padded_bytes(rows, cols, itemsize):
    # Mosaic pads VMEM buffers to (8, 128) tiles.
    return _round_up(rows, 8) * _round_up(cols, 128) * itemsize


def _mlp_kernel(z_ref, w1_ref, b1_ref, w2_ref, b2_ref, w3_ref, b3_ref,
                feat_out_ref, feat_ref, *, compute_dtype):
    # Layer 1: (tb/8, 8D) @ (8D, 8D) block-diagonal W1 -> f32 acc, bias, ReLU.
    x = z_ref[...].astype(compute_dtype)
    h1 = jnp.dot(x, w1_ref[...], preferred_element_type=jnp.float32)
    h1 = jnp.maximum(h1 + b1_ref[...], 0.0)
    # Layer 2: (tb/8, 8D) @ (8D, 8E) block-diagonal W2 -> f32 acc, bias, ReLU.
    h2 = jnp.dot(h1.astype(compute_dtype), w2_ref[...],
                 preferred_element_type=jnp.float32)
    h2 = jnp.maximum(h2 + b2_ref[...], 0.0)
    # feat store: (tb/8, 8E) is 128 lanes wide at E=16 -> dense, unmasked vst.
    feat_ref[...] = h2.astype(feat_ref.dtype)
    # Output layer: (tb/8, 8E) @ (8E, 8) block-diagonal w3, kept in f32 so that
    # feat_out matches feat @ w3 + b3 exactly (negligible cost at N=8).
    o = jnp.dot(h2, w3_ref[...], preferred_element_type=jnp.float32)
    feat_out_ref[...] = (o + b3_ref[0, 0]).astype(feat_out_ref.dtype)


def memb_inf_attk_v3(z, w1, b1, w2, b2, w3, b3, *, tb=8192,
                     compute_dtype=jnp.bfloat16, vmem_limit_bytes=None):
    """z: (B, latent_dim). Weights in (in, out) layout (i.e. W_pt.T), biases
    (1, out). Returns (feat_out: (B, 1), feat: (B, e_dim)) in z.dtype."""
    B, D = z.shape
    E = w2.shape[1]
    assert w1.shape == (D, D) and b1.shape[-1] == D
    assert w2.shape == (D, E) and b2.shape[-1] == E
    assert w3.shape == (E, 1)
    out_dtype = z.dtype
    cdt = jnp.dtype(compute_dtype)
    in_isz = jnp.dtype(z.dtype).itemsize
    out_isz = jnp.dtype(out_dtype).itemsize

    # ---- per-generation VMEM budget (lane/sublane padded) -------------------
    try:
        vmem_phys = int(getattr(pltpu.get_tpu_info(), "vmem_capacity_bytes",
                                64 << 20))
    except Exception:
        vmem_phys = 64 << 20
    # v5e/v6e: 128 MiB physical -> allow ~100 MiB. v7x (or unknown): 64 MiB/TC
    # -> cap at 48 MiB so double-buffered tiles + weights + scratch always fit.
    budget = (100 << 20) if vmem_phys >= (96 << 20) else (48 << 20)

    # Double-buffered tile bytes per batch row (packed widths, padded to 128).
    per_row = 2 * (_round_up(D * GROUP, 128) * in_isz         # z packed
                   + _round_up(E * GROUP, 128) * out_isz      # feat packed
                   + _round_up(GROUP, 128) * out_isz) // GROUP  # feat_out packed
    w_fixed = 2 * (_padded_bytes(D * GROUP, D * GROUP, cdt.itemsize)
                   + _padded_bytes(D * GROUP, E * GROUP, cdt.itemsize)
                   + _padded_bytes(E * GROUP, GROUP, 4)
                   + _padded_bytes(1, D * GROUP, 4)
                   + _padded_bytes(1, E * GROUP, 4))
    headroom = 4 << 20                      # Mosaic internal scratch etc.
    tb_vmem_max = max(ROW_ALIGN,
                      (budget - w_fixed - headroom) // per_row
                      // ROW_ALIGN * ROW_ALIGN)

    # ---- batch tile / grid selection ----------------------------------------
    tb_cap = min(max(ROW_ALIGN, _round_up(int(tb), ROW_ALIGN)), tb_vmem_max)
    b_pad_min = _round_up(B, ROW_ALIGN)
    if b_pad_min <= tb_cap:
        if b_pad_min >= 2048:
            # Big enough to amortize two grid steps -> split across both TCs.
            n_tiles = 2
            tb_eff = _round_up(pl.cdiv(b_pad_min, 2), ROW_ALIGN)
        else:
            n_tiles = 1
            tb_eff = b_pad_min
    else:
        n_tiles = pl.cdiv(B, tb_cap)
        if n_tiles % 2:                     # keep megacore sharding balanced
            n_tiles += 1
        tb_eff = _round_up(pl.cdiv(B, n_tiles), ROW_ALIGN)
    Bp = tb_eff * n_tiles
    rb = tb_eff // GROUP                    # packed rows per block

    # ---- pad ragged batch, present the free row-packed views ----------------
    z_in = z if Bp == B else jnp.pad(z, ((0, Bp - B), (0, 0)))
    z_packed = z_in.reshape(Bp // GROUP, D * GROUP)      # same HBM bytes

    # Block-diagonal weights: 8 copies of each layer's W on the diagonal so a
    # whole packed row goes through a single MXU matmul (no in-kernel relayout).
    eye = jnp.eye(GROUP, dtype=jnp.float32)
    w1_blk = jnp.kron(eye, w1.astype(jnp.float32)).astype(cdt)   # (8D, 8D)
    w2_blk = jnp.kron(eye, w2.astype(jnp.float32)).astype(cdt)   # (8D, 8E)
    w3_blk = jnp.kron(eye, w3.astype(jnp.float32))               # (8E, 8), f32
    b1_t = jnp.tile(b1.reshape(1, D).astype(jnp.float32), (1, GROUP))  # (1, 8D)
    b2_t = jnp.tile(b2.reshape(1, E).astype(jnp.float32), (1, GROUP))  # (1, 8E)
    b3_s = jnp.asarray(b3, jnp.float32).reshape(1, 1)                   # SMEM

    if vmem_limit_bytes is None:
        vmem_limit_bytes = int(budget)

    const = lambda i: (0, 0)
    kernel = functools.partial(_mlp_kernel, compute_dtype=cdt)

    feat_out_p, feat_p = pl.pallas_call(
        kernel,
        out_shape=(
            jax.ShapeDtypeStruct((Bp // GROUP, GROUP), out_dtype),      # feat_out
            jax.ShapeDtypeStruct((Bp // GROUP, E * GROUP), out_dtype),  # feat
        ),
        grid_spec=pltpu.PrefetchScalarGridSpec(
            num_scalar_prefetch=0,
            grid=(n_tiles,),
            in_specs=[
                pl.BlockSpec((rb, D * GROUP), lambda i: (i, 0)),        # z packed
                pl.BlockSpec((D * GROUP, D * GROUP), const),            # W1 blkdiag
                pl.BlockSpec((1, D * GROUP), const),                    # b1 tiled
                pl.BlockSpec((D * GROUP, E * GROUP), const),            # W2 blkdiag
                pl.BlockSpec((1, E * GROUP), const),                    # b2 tiled
                pl.BlockSpec((E * GROUP, GROUP), const),                # w3 blkdiag
                pl.BlockSpec(memory_space=pltpu.MemorySpace.SMEM),      # b3 scalar
            ],
            out_specs=[
                pl.BlockSpec((rb, GROUP), lambda i: (i, 0)),            # feat_out
                pl.BlockSpec((rb, E * GROUP), lambda i: (i, 0)),        # feat
            ],
        ),
        compiler_params=pltpu.CompilerParams(
            dimension_semantics=("parallel",),
            vmem_limit_bytes=int(vmem_limit_bytes),
        ),
    )(z_packed, w1_blk, b1_t, w2_blk, b2_t, w3_blk, b3_s)

    # Free row-major un-packing back to the module's output shapes.
    feat_out = feat_out_p.reshape(Bp, 1)[:B]
    feat = feat_p.reshape(Bp, E)[:B]
    return feat_out, feat


if __name__ == "__main__":
    # args.latent_dim = 32, args.e_dim = 16
    LATENT_DIM, E_DIM = 32, 16

    key = jax.random.PRNGKey(0)
    kz, k1, k2, k3, k4, k5, k6, kz2 = jax.random.split(key, 8)

    def init_w(k, fan_in, fan_out):
        bound = 1.0 / (fan_in ** 0.5)
        return jax.random.uniform(k, (fan_in, fan_out), jnp.float32,
                                  minval=-bound, maxval=bound)

    def init_b(k, fan_in, fan_out):
        bound = 1.0 / (fan_in ** 0.5)
        return jax.random.uniform(k, (1, fan_out), jnp.float32,
                                  minval=-bound, maxval=bound)

    w1 = init_w(k1, LATENT_DIM, LATENT_DIM)
    b1 = init_b(k2, LATENT_DIM, LATENT_DIM)
    w2 = init_w(k3, LATENT_DIM, E_DIM)
    b2 = init_b(k4, LATENT_DIM, E_DIM)
    w3 = init_w(k5, E_DIM, 1)
    b3 = init_b(k6, E_DIM, 1)

    def reference(z):
        h1 = jnp.maximum(z @ w1 + b1, 0.0)
        h2 = jnp.maximum(h1 @ w2 + b2, 0.0)
        return h2 @ w3 + b3, h2

    # 1) Small batch, f32 compute path: exact check, single grid step.
    B = 8
    z = jax.random.normal(kz, (B, LATENT_DIM), dtype=jnp.float32)
    fo, ft = memb_inf_attk_v3(z, w1, b1, w2, b2, w3, b3,
                              compute_dtype=jnp.float32)
    jax.block_until_ready((fo, ft))
    ro, rf = reference(z)
    assert fo.shape == (B, 1) and ft.shape == (B, E_DIM)
    assert jnp.allclose(fo, ro, atol=1e-5, rtol=1e-5)
    assert jnp.allclose(ft, rf, atol=1e-5, rtol=1e-5)

    # 2) Ragged batch, default bf16 MXU path: multi-step even grid + padding.
    B2 = 2000
    z2 = jax.random.normal(kz2, (B2, LATENT_DIM), dtype=jnp.float32)
    fo2, ft2 = memb_inf_attk_v3(z2, w1, b1, w2, b2, w3, b3, tb=512)
    jax.block_until_ready((fo2, ft2))
    ro2, rf2 = reference(z2)
    assert fo2.shape == (B2, 1) and ft2.shape == (B2, E_DIM)
    assert jnp.allclose(fo2, ro2, atol=5e-2, rtol=5e-2)
    assert jnp.allclose(ft2, rf2, atol=5e-2, rtol=5e-2)

    # 3) Same ragged batch, f32 compute path: tight check through the
    #    multi-tile / padding / even-step logic.
    fo3, ft3 = memb_inf_attk_v3(z2, w1, b1, w2, b2, w3, b3, tb=512,
                                compute_dtype=jnp.float32)
    jax.block_until_ready((fo3, ft3))
    assert jnp.allclose(fo3, ro2, atol=1e-4, rtol=1e-4)
    assert jnp.allclose(ft3, rf2, atol=1e-4, rtol=1e-4)

    print("KERNEL_OK")
</pallas_src>

<mosaic_0001>
module attributes {stable_mosaic.version = 11 : i64} {
  func.func @_mlp_kernel(%arg0: i32, %arg1: memref<8x256xf32, #tpu.memory_space<vmem>>, %arg2: memref<256x256xf32, #tpu.memory_space<vmem>>, %arg3: memref<1x256xf32, #tpu.memory_space<vmem>>, %arg4: memref<256x128xf32, #tpu.memory_space<vmem>>, %arg5: memref<1x128xf32, #tpu.memory_space<vmem>>, %arg6: memref<128x8xf32, #tpu.memory_space<vmem>>, %arg7: memref<1x1xf32, #tpu.memory_space<smem>>, %arg8: memref<8x8xf32, #tpu.memory_space<vmem>>, %arg9: memref<8x128xf32, #tpu.memory_space<vmem>>) attributes {dimension_semantics = [#tpu.dimension_semantics<parallel>], iteration_bounds = array<i64: 1>, scalar_prefetch = 0 : i64, scratch_operands = 0 : i64, tpu.core_type = #tpu.core_type<tc>, window_params = [{transform_indices = @transform_0, window_bounds = array<i64: 8, 256>}, {pipeline_mode = #tpu.pipeline_mode<synchronous>, transform_indices = @transform_1, window_bounds = array<i64: 256, 256>}, {pipeline_mode = #tpu.pipeline_mode<synchronous>, transform_indices = @transform_2, window_bounds = array<i64: 1, 256>}, {pipeline_mode = #tpu.pipeline_mode<synchronous>, transform_indices = @transform_3, window_bounds = array<i64: 256, 128>}, {pipeline_mode = #tpu.pipeline_mode<synchronous>, transform_indices = @transform_4, window_bounds = array<i64: 1, 128>}, {pipeline_mode = #tpu.pipeline_mode<synchronous>, transform_indices = @transform_5, window_bounds = array<i64: 128, 8>}, {transform_indices = @transform_6, window_bounds = array<i64: 1, 1>}, {transform_indices = @transform_7, window_bounds = array<i64: 8, 8>}, {transform_indices = @transform_8, window_bounds = array<i64: 8, 128>}]} {
    %c0 = arith.constant 0 : index
    %c0_0 = arith.constant 0 : index
    %0 = vector.load %arg1[%c0, %c0_0] : memref<8x256xf32, #tpu.memory_space<vmem>>, vector<8x256xf32>
    %c0_1 = arith.constant 0 : index
    %c0_2 = arith.constant 0 : index
    %1 = vector.load %arg2[%c0_1, %c0_2] : memref<256x256xf32, #tpu.memory_space<vmem>>, vector<256x256xf32>
    %cst = arith.constant dense<0.000000e+00> : vector<8x256xf32>
    %2 = tpu.matmul %0, %1, %cst {dimension_numbers = #tpu.dot_dimension_numbers<[1], [0], [0], [1], [0, 0, 1, 1], [], []>} : vector<8x256xf32>, vector<256x256xf32>, vector<8x256xf32> -> vector<8x256xf32>
    %c0_3 = arith.constant 0 : index
    %c0_4 = arith.constant 0 : index
    %3 = vector.load %arg3[%c0_3, %c0_4] : memref<1x256xf32, #tpu.memory_space<vmem>>, vector<1x256xf32>
    %4 = vector.broadcast %3 : vector<1x256xf32> to vector<8x256xf32>
    %5 = arith.addf %2, %4 : vector<8x256xf32>
    %cst_5 = arith.constant 0.000000e+00 : f32
    %6 = vector.broadcast %cst_5 : f32 to vector<8x256xf32>
    %7 = arith.maximumf %5, %6 : vector<8x256xf32>
    %c0_6 = arith.constant 0 : index
    %c0_7 = arith.constant 0 : index
    %8 = vector.load %arg4[%c0_6, %c0_7] : memref<256x128xf32, #tpu.memory_space<vmem>>, vector<256x128xf32>
    %cst_8 = arith.constant dense<0.000000e+00> : vector<8x128xf32>
    %9 = tpu.matmul %7, %8, %cst_8 {dimension_numbers = #tpu.dot_dimension_numbers<[1], [0], [0], [1], [0, 0, 1, 1], [], []>} : vector<8x256xf32>, vector<256x128xf32>, vector<8x128xf32> -> vector<8x128xf32>
    %c0_9 = arith.constant 0 : index
    %c0_10 = arith.constant 0 : index
    %10 = vector.load %arg5[%c0_9, %c0_10] : memref<1x128xf32, #tpu.memory_space<vmem>>, vector<1x128xf32>
    %11 = vector.broadcast %10 : vector<1x128xf32> to vector<8x128xf32>
    %12 = arith.addf %9, %11 : vector<8x128xf32>
    %cst_11 = arith.constant 0.000000e+00 : f32
    %13 = vector.broadcast %cst_11 : f32 to vector<8x128xf32>
    %14 = arith.maximumf %12, %13 : vector<8x128xf32>
    %c0_12 = arith.constant 0 : index
    %c0_13 = arith.constant 0 : index
    %15 = vector.load %arg9[%c0_12, %c0_13] : memref<8x128xf32, #tpu.memory_space<vmem>>, vector<8x128xf32>
    tpu.vector_store %arg9[%c0_12, %c0_13], %14 {strides = array<i32>} : memref<8x128xf32, #tpu.memory_space<vmem>>, vector<8x128xf32>,
    %c0_14 = arith.constant 0 : index
    %c0_15 = arith.constant 0 : index
    %16 = vector.load %arg6[%c0_14, %c0_15] : memref<128x8xf32, #tpu.memory_space<vmem>>, vector<128x8xf32>
    %cst_16 = arith.constant dense<0.000000e+00> : vector<8x8xf32>
    %17 = tpu.matmul %14, %16, %cst_16 {dimension_numbers = #tpu.dot_dimension_numbers<[1], [0], [0], [1], [0, 0, 1, 1], [], []>} : vector<8x128xf32>, vector<128x8xf32>, vector<8x8xf32> -> vector<8x8xf32>
    %c0_17 = arith.constant 0 : index
    %c0_18 = arith.constant 0 : index
    %18 = memref.load %arg7[%c0_17, %c0_18] : memref<1x1xf32, #tpu.memory_space<smem>>
    %19 = vector.broadcast %18 : f32 to vector<8x8xf32>
    %20 = arith.addf %17, %19 : vector<8x8xf32>
    %c0_19 = arith.constant 0 : index
    %c0_20 = arith.constant 0 : index
    %21 = vector.load %arg8[%c0_19, %c0_20] : memref<8x8xf32, #tpu.memory_space<vmem>>, vector<8x8xf32>
    tpu.vector_store %arg8[%c0_19, %c0_20], %20 {strides = array<i32>} : memref<8x8xf32, #tpu.memory_space<vmem>>, vector<8x8xf32>,
    return
  }
  func.func @transform_0(%arg0: i32) -> (i32, i32) {
    %c0_i32 = arith.constant 0 : i32
    %c0_i32_0 = arith.constant 0 : i32
    return %arg0, %c0_i32 : i32, i32
  }
  func.func @transform_1(%arg0: i32) -> (i32, i32) {
    %c0_i32 = arith.constant 0 : i32
    %c0_i32_0 = arith.constant 0 : i32
    %c0_i32_1 = arith.constant 0 : i32
    return %c0_i32, %c0_i32_0 : i32, i32
  }
  func.func @transform_2(%arg0: i32) -> (i32, i32) {
    %c0_i32 = arith.constant 0 : i32
    %c0_i32_0 = arith.constant 0 : i32
    %c0_i32_1 = arith.constant 0 : i32
    return %c0_i32, %c0_i32_0 : i32, i32
  }
  func.func @transform_3(%arg0: i32) -> (i32, i32) {
    %c0_i32 = arith.constant 0 : i32
    %c0_i32_0 = arith.constant 0 : i32
    %c0_i32_1 = arith.constant 0 : i32
    return %c0_i32, %c0_i32_0 : i32, i32
  }
  func.func @transform_4(%arg0: i32) -> (i32, i32) {
    %c0_i32 = arith.constant 0 : i32
    %c0_i32_0 = arith.constant 0 : i32
    %c0_i32_1 = arith.constant 0 : i32
    return %c0_i32, %c0_i32_0 : i32, i32
  }
  func.func @transform_5(%arg0: i32) -> (i32, i32) {
    %c0_i32 = arith.constant 0 : i32
    %c0_i32_0 = arith.constant 0 : i32
    %c0_i32_1 = arith.constant 0 : i32
    return %c0_i32, %c0_i32_0 : i32, i32
  }
  func.func @transform_6(%arg0: i32) -> (i32, i32) {
    %c0_i32 = arith.constant 0 : i32
    %c0_i32_0 = arith.constant 0 : i32
    %c0_i32_1 = arith.constant 0 : i32
    return %c0_i32, %c0_i32_0 : i32, i32
  }
  func.func @transform_7(%arg0: i32) -> (i32, i32) {
    %c0_i32 = arith.constant 0 : i32
    %c0_i32_0 = arith.constant 0 : i32
    return %arg0, %c0_i32 : i32, i32
  }
  func.func @transform_8(%arg0: i32) -> (i32, i32) {
    %c0_i32 = arith.constant 0 : i32
    %c0_i32_0 = arith.constant 0 : i32
    return %arg0, %c0_i32 : i32, i32
  }
}

</mosaic_0001>

<llo_original>
// kernel: tpu_custom_call.1
$region0: #{tpu_custom_call.1}
  #allocation0 [shape = 'u32[]', space=smem, size = 0x4, offset = 0x4, fixed_abs, tag = 'smem constant byte address 0x4 - core index']
  #allocation1 [shape = 'u32[144,128]{1,0:T(1,128)}', space=vmem, size = 0x12000, scoped, tag = 'internal scratch']
  #allocation2 [shape = 'f32[1,1]{1,0:T(1,128)S(6)}', space=smem, size = 0x200, scoped, tag = 'scoped memory for tpu_custom_call.1']
  %s0 = inlined_call_operand.vmem [shape: f32[8,256], index: 0, kind: input, shape index: {}]
  %s1 = inlined_call_operand.hbm [shape: f32[256,256], index: 1, kind: input, shape index: {}]
  %s2 = inlined_call_operand.vmem [shape: f32[1,256], index: 2, kind: input, shape index: {}]
  %s3 = inlined_call_operand.hbm [shape: f32[256,128], index: 3, kind: input, shape index: {}]
  %s4 = inlined_call_operand.vmem [shape: f32[1,128], index: 4, kind: input, shape index: {}]
  %s5 = inlined_call_operand.vmem [shape: f32[128,8], index: 5, kind: input, shape index: {}]
  %s6 = inlined_call_operand.<no memory space> [shape: f32[1,1], index: 6, kind: input, shape index: {}]
  %s7 = inlined_call_operand.hbm [shape: f32[8,8], index: 7, kind: output, shape index: {0}]
  %s8 = inlined_call_operand.hbm [shape: f32[8,128], index: 8, kind: output, shape index: {1}]
  %9 = xla_tuple %s7, %s8
  %s10 = sld [smem:[#allocation0]]
  $region54: #{tpu_custom_call.1} parent=0
    _
  %s12 = ssub.s32 1, %s10
  %s13 = scalar_select 0, %s12, %s10
  %14 = sst [smem:[#allocation2]] %s6
  $region1: #{tpu_custom_call.1} parent=0
    #allocation3 [shape = 'u8[262144]{0}', space=vmem, size = 0x40000, scoped, tag = 'input window, operand 1, single buffered']
    #allocation4 [shape = 's32[1]{0}', space=sflag, size = 0x4, scoped, tag = 'scoped memory for tpu_custom_call.1']
    #allocation5 [shape = 's32[1]{0}', space=sflag, size = 0x4, scoped, tag = 'scoped memory for tpu_custom_call.1']
    #allocation6 [shape = 'u8[131072]{0}', space=vmem, size = 0x20000, scoped, tag = 'input window, operand 3, single buffered']
    #allocation7 [shape = 's32[1]{0}', space=sflag, size = 0x4, scoped, tag = 'scoped memory for tpu_custom_call.1']
    #allocation8 [shape = 'u8[4096]{0}', space=vmem, size = 0x1000, scoped, tag = 'output window, operand 0, single buffered']
    #allocation9 [shape = 'u8[4096]{0}', space=vmem, size = 0x1000, scoped, tag = 'output window, operand 1, single buffered']
    #allocation10 [shape = 's32[1]{0}', space=sflag, size = 0x4, scoped, tag = 'scoped memory for tpu_custom_call.1']
    %15 = vsyncpa [#allocation4], 0
    %16 = vsyncpa [#allocation7], 0
    %17 = vsyncpa [#allocation5], 0
    %18 = vsyncpa [#allocation10], 0
    // Predicated region
    $region2: #{tpu_custom_call.1} parent=1 // pred_check
      _
    $region3: #{tpu_custom_call.1} parent=1 // pred_check_branch
      %20 = sbr.rel (0) target = $region5
    $region4: #{tpu_custom_call.1} parent=1 // pred_region
      _
    $region5: #{tpu_custom_call.1} parent=1 // pred_fallthru
      _
    // Predicated region
    $region6: #{tpu_custom_call.1} parent=1 // pred_check
      _
    $region7: #{tpu_custom_call.1} parent=1 // pred_check_branch
      %22 = sbr.rel (0) target = $region9
    $region8: #{tpu_custom_call.1} parent=1 // pred_region
      %s24 = ssub.s32 8192, 8192
      %25 = vsyncadd [#allocation4], %s24
      %s26 = sshll.u32 [#allocation3], 4
      %s27 = int_to_ptr.vmem [resolvable:$true] %s26
      %32 = dma.hbm_to_vmem [thread:$0]  %s1, 8192, %s27, [#allocation4], 256, 256, 16
    $region9: #{tpu_custom_call.1} parent=1 // pred_fallthru
      _
    // Predicated region
    $region10: #{tpu_custom_call.1} parent=1 // pred_check
      _
    $region11: #{tpu_custom_call.1} parent=1 // pred_check_branch
      %34 = sbr.rel (0) target = $region13
    $region12: #{tpu_custom_call.1} parent=1 // pred_region
      _
    $region13: #{tpu_custom_call.1} parent=1 // pred_fallthru
      _
    // Predicated region
    $region14: #{tpu_custom_call.1} parent=1 // pred_check
      _
    $region15: #{tpu_custom_call.1} parent=1 // pred_check_branch
      %36 = sbr.rel (0) target = $region17
    $region16: #{tpu_custom_call.1} parent=1 // pred_region
      %s38 = ssub.s32 4096, 4096
      %39 = vsyncadd [#allocation7], %s38
      %s40 = sshll.u32 [#allocation6], 4
      %s41 = int_to_ptr.vmem [resolvable:$true] %s40
      %46 = dma.hbm_to_vmem [thread:$0]  %s3, 4096, %s41, [#allocation7], 128, 128, 8
    $region17: #{tpu_custom_call.1} parent=1 // pred_fallthru
      _
    // Predicated region
    $region18: #{tpu_custom_call.1} parent=1 // pred_check
      _
    $region19: #{tpu_custom_call.1} parent=1 // pred_check_branch
      %48 = sbr.rel (0) target = $region21
    $region20: #{tpu_custom_call.1} parent=1 // pred_region
      _
    $region21: #{tpu_custom_call.1} parent=1 // pred_fallthru
      _
    // Predicated region
    $region22: #{tpu_custom_call.1} parent=1 // pred_check
      _
    $region23: #{tpu_custom_call.1} parent=1 // pred_check_branch
      %50 = sbr.rel (0) target = $region25
    $region24: #{tpu_custom_call.1} parent=1 // pred_region
      _
    $region25: #{tpu_custom_call.1} parent=1 // pred_fallthru
      _
    // Predicated region
    $region26: #{tpu_custom_call.1} parent=1 // pred_check
      _
    $region27: #{tpu_custom_call.1} parent=1 // pred_check_branch
      %52 = sbr.rel (0) target = $region29
    $region28: #{tpu_custom_call.1} parent=1 // pred_region
      _
    $region29: #{tpu_custom_call.1} parent=1 // pred_fallthru
      _
    // Predicated region
    $region30: #{tpu_custom_call.1} parent=1 // pred_check
      _
    $region31: #{tpu_custom_call.1} parent=1 // pred_check_branch
      %54 = sbr.rel (0) target = $region33
    $region32: #{tpu_custom_call.1} parent=1 // pred_region
      %55 = dma.done [#allocation4], 8192
    $region33: #{tpu_custom_call.1} parent=1 // pred_fallthru
      _
    // Predicated region
    $region34: #{tpu_custom_call.1} parent=1 // pred_check
      _
    $region35: #{tpu_custom_call.1} parent=1 // pred_check_branch
      %57 = sbr.rel (0) target = $region37
    $region36: #{tpu_custom_call.1} parent=1 // pred_region
      %58 = dma.done [#allocation7], 4096
    $region37: #{tpu_custom_call.1} parent=1 // pred_fallthru
      _
    %v59 = vld [vmem:[%s0] sm:$0xff]
    %v60 = vld [vmem:[%s0 + $0x8] sm:$0xff]
    %v61 = vld [vmem:[#allocation3] sm:$0xff]
    %v62 = vld [vmem:[#allocation3 + $0x8] sm:$0xff]
    %v63 = vld [vmem:[#allocation3 + $0x10] sm:$0xff]
    %v64 = vld [vmem:[#allocation3 + $0x18] sm:$0xff]
    %v65 = vld [vmem:[#allocation3 + $0x20] sm:$0xff]
    %v66 = vld [vmem:[#allocation3 + $0x28] sm:$0xff]
    %v67 = vld [vmem:[#allocation3 + $0x30] sm:$0xff]
    %v68 = vld [vmem:[#allocation3 + $0x38] sm:$0xff]
    %v69 = vld [vmem:[#allocation3 + $0x40] sm:$0xff]
    %v70 = vld [vmem:[#allocation3 + $0x48] sm:$0xff]
    %v71 = vld [vmem:[#allocation3 + $0x50] sm:$0xff]
    %v72 = vld [vmem:[#allocation3 + $0x58] sm:$0xff]
    %v73 = vld [vmem:[#allocation3 + $0x60] sm:$0xff]
    %v74 = vld [vmem:[#allocation3 + $0x68] sm:$0xff]
    %v75 = vld [vmem:[#allocation3 + $0x70] sm:$0xff]
    %v76 = vld [vmem:[#allocation3 + $0x78] sm:$0xff]
    %v77 = vld [vmem:[#allocation3 + $0x80] sm:$0xff]
    %v78 = vld [vmem:[#allocation3 + $0x88] sm:$0xff]
    %v79 = vld [vmem:[#allocation3 + $0x90] sm:$0xff]
    %v80 = vld [vmem:[#allocation3 + $0x98] sm:$0xff]
    %v81 = vld [vmem:[#allocation3 + $0xa0] sm:$0xff]
    %v82 = vld [vmem:[#allocation3 + $0xa8] sm:$0xff]
    %v83 = vld [vmem:[#allocation3 + $0xb0] sm:$0xff]
    %v84 = vld [vmem:[#allocation3 + $0xb8] sm:$0xff]
    %v85 = vld [vmem:[#allocation3 + $0xc0] sm:$0xff]
    %v86 = vld [vmem:[#allocation3 + $0xc8] sm:$0xff]
    %v87 = vld [vmem:[#allocation3 + $0xd0] sm:$0xff]
    %v88 = vld [vmem:[#allocation3 + $0xd8] sm:$0xff]
    %v89 = vld [vmem:[#allocation3 + $0xe0] sm:$0xff]
    %v90 = vld [vmem:[#allocation3 + $0xe8] sm:$0xff]
    %v91 = vld [vmem:[#allocation3 + $0xf0] sm:$0xff]
    %v92 = vld [vmem:[#allocation3 + $0xf8] sm:$0xff]
    %v93 = vld [vmem:[#allocation3 + $0x100] sm:$0xff]
    %v94 = vld [vmem:[#allocation3 + $0x108] sm:$0xff]
    %v95 = vld [vmem:[#allocation3 + $0x110] sm:$0xff]
    %v96 = vld [vmem:[#allocation3 + $0x118] sm:$0xff]
    %v97 = vld [vmem:[#allocation3 + $0x120] sm:$0xff]
    %v98 = vld [vmem:[#allocation3 + $0x128] sm:$0xff]
    %v99 = vld [vmem:[#allocation3 + $0x130] sm:$0xff]
    %v100 = vld [vmem:[#allocation3 + $0x138] sm:$0xff]
    %v101 = vld [vmem:[#allocation3 + $0x140] sm:$0xff]
    %v102 = vld [vmem:[#allocation3 + $0x148] sm:$0xff]
    %v103 = vld [vmem:[#allocation3 + $0x150] sm:$0xff]
    %v104 = vld [vmem:[#allocation3 + $0x158] sm:$0xff]
    %v105 = vld [vmem:[#allocation3 + $0x160] sm:$0xff]
    %v106 = vld [vmem:[#allocation3 + $0x168] sm:$0xff]
    %v107 = vld [vmem:[#allocation3 + $0x170] sm:$0xff]
    %v108 = vld [vmem:[#allocation3 + $0x178] sm:$0xff]
    %v109 = vld [vmem:[#allocation3 + $0x180] sm:$0xff]
    %v110 = vld [vmem:[#allocation3 + $0x188] sm:$0xff]
    %v111 = vld [vmem:[#allocation3 + $0x190] sm:$0xff]
    %v112 = vld [vmem:[#allocation3 + $0x198] sm:$0xff]
    %v113 = vld [vmem:[#allocation3 + $0x1a0] sm:$0xff]
    %v114 = vld [vmem:[#allocation3 + $0x1a8] sm:$0xff]
    %v115 = vld [vmem:[#allocation3 + $0x1b0] sm:$0xff]
    %v116 = vld [vmem:[#allocation3 + $0x1b8] sm:$0xff]
    %v117 = vld [vmem:[#allocation3 + $0x1c0] sm:$0xff]
    %v118 = vld [vmem:[#allocation3 + $0x1c8] sm:$0xff]
    %v119 = vld [vmem:[#allocation3 + $0x1d0] sm:$0xff]
    %v120 = vld [vmem:[#allocation3 + $0x1d8] sm:$0xff]
    %v121 = vld [vmem:[#allocation3 + $0x1e0] sm:$0xff]
    %v122 = vld [vmem:[#allocation3 + $0x1e8] sm:$0xff]
    %v123 = vld [vmem:[#allocation3 + $0x1f0] sm:$0xff]
    %v124 = vld [vmem:[#allocation3 + $0x1f8] sm:$0xff]
    %v125 = vld [vmem:[%s2] sm:$0x3]
    %v127 = vlaneseq
    %v128 = vshrl.u32 %v127, 7
    %v129 = vsub.s32 0, %v128
    %v130 = vrot.slane %v125, %v129
    %v131 = vlaneseq
    %v132 = vshrl.u32 %v131, 7
    %v133 = vsub.s32 1, %v132
    %v134 = vrot.slane %v125, %v133
    %137 = vmatprep.subr.mxu0 %v92
    %138 = vmatpush1.msra.mxu0 %v91
    %139 = vmatprep.subr.mxu0 %v90
    %140 = vmatpush1.msra.mxu0 %v89
    %141 = vmatprep.subr.mxu0 %v88
    %142 = vmatpush1.msra.mxu0 %v87
    %143 = vmatprep.subr.mxu0 %v86
    %144 = vmatpush1.msra.mxu0 %v85
    %145 = vmatprep.subr.mxu0 %v84
    %146 = vmatpush1.msra.mxu0 %v83
    %147 = vmatprep.subr.mxu0 %v82
    %148 = vmatpush1.msra.mxu0 %v81
    %149 = vmatprep.subr.mxu0 %v80
    %150 = vmatpush1.msra.mxu0 %v79
    %151 = vmatprep.subr.mxu0 %v78
    %152 = vmatpush1.msra.mxu0 %v77
    %153 = vmatprep.subr.mxu0 %v76
    %154 = vmatpush1.msra.mxu0 %v75
    %155 = vmatprep.subr.mxu0 %v74
    %156 = vmatpush1.msra.mxu0 %v73
    %157 = vmatprep.subr.mxu0 %v72
    %158 = vmatpush1.msra.mxu0 %v71
    %159 = vmatprep.subr.mxu0 %v70
    %160 = vmatpush1.msra.mxu0 %v69
    %161 = vmatprep.subr.mxu0 %v68
    %162 = vmatpush1.msra.mxu0 %v67
    %163 = vmatprep.subr.mxu0 %v66
    %164 = vmatpush1.msra.mxu0 %v65
    %165 = vmatprep.subr.mxu0 %v64
    %166 = vmatpush1.msra.mxu0 %v63
    %167 = vmatprep.subr.mxu0 %v62
    %168 = vmatpush1.msra.mxu0 %v61
    %169 = vmatprep.subr.mxu0 %v124
    %170 = vmatpush2.msra.mxu0 %v123
    %171 = vmatprep.subr.mxu0 %v122
    %172 = vmatpush2.msra.mxu0 %v121
    %173 = vmatprep.subr.mxu0 %v120
    %174 = vmatpush2.msra.mxu0 %v119
    %175 = vmatprep.subr.mxu0 %v118
    %176 = vmatpush2.msra.mxu0 %v117
    %177 = vmatprep.subr.mxu0 %v116
    %178 = vmatpush2.msra.mxu0 %v115
    %179 = vmatprep.subr.mxu0 %v114
    %180 = vmatpush2.msra.mxu0 %v113
    %181 = vmatprep.subr.mxu0 %v112
    %182 = vmatpush2.msra.mxu0 %v111
    %183 = vmatprep.subr.mxu0 %v110
    %184 = vmatpush2.msra.mxu0 %v109
    %185 = vmatprep.subr.mxu0 %v108
    %186 = vmatpush2.msra.mxu0 %v107
    %187 = vmatprep.subr.mxu0 %v106
    %188 = vmatpush2.msra.mxu0 %v105
    %189 = vmatprep.subr.mxu0 %v104
    %190 = vmatpush2.msra.mxu0 %v103
    %191 = vmatprep.subr.mxu0 %v102
    %192 = vmatpush2.msra.mxu0 %v101
    %193 = vmatprep.subr.mxu0 %v100
    %194 = vmatpush2.msra.mxu0 %v99
    %195 = vmatprep.subr.mxu0 %v98
    %196 = vmatpush2.msra.mxu0 %v97
    %197 = vmatprep.subr.mxu0 %v96
    %198 = vmatpush2.msra.mxu0 %v95
    %199 = vmatprep.subr.mxu0 %v94
    %200 = vmatpush2.msra.mxu0 %v93
    %201 = vmatprep.mubr.f32.mxu0 %v60
    %202 = vmatmul.mubr.f32.gmra.mxu0 %v59
    %v203 = vpop.f32.mrf.mxu0
    %v204 = vadd.f32 %v130, %v203
    %v205 = vpop.f32.mrf.mxu0
    %v206 = vadd.f32 %v134, %v205
    %207 = vdwg.mxu0
    %v208 = vmax.f32 %v204, 0.0
    %v209 = vmax.f32 %v206, 0.0
    %v210 = vld [vmem:[#allocation6] sm:$0xff]
    %v211 = vld [vmem:[#allocation6 + $0x8] sm:$0xff]
    %v212 = vld [vmem:[#allocation6 + $0x10] sm:$0xff]
    %v213 = vld [vmem:[#allocation6 + $0x18] sm:$0xff]
    %v214 = vld [vmem:[#allocation6 + $0x20] sm:$0xff]
    %v215 = vld [vmem:[#allocation6 + $0x28] sm:$0xff]
    %v216 = vld [vmem:[#allocation6 + $0x30] sm:$0xff]
    %v217 = vld [vmem:[#allocation6 + $0x38] sm:$0xff]
    %v218 = vld [vmem:[#allocation6 + $0x40] sm:$0xff]
    %v219 = vld [vmem:[#allocation6 + $0x48] sm:$0xff]
    %v220 = vld [vmem:[#allocation6 + $0x50] sm:$0xff]
    %v221 = vld [vmem:[#allocation6 + $0x58] sm:$0xff]
    %v222 = vld [vmem:[#allocation6 + $0x60] sm:$0xff]
    %v223 = vld [vmem:[#allocation6 + $0x68] sm:$0xff]
    %v224 = vld [vmem:[#allocation6 + $0x70] sm:$0xff]
    %v225 = vld [vmem:[#allocation6 + $0x78] sm:$0xff]
    %v226 = vld [vmem:[#allocation6 + $0x80] sm:$0xff]
    %v227 = vld [vmem:[#allocation6 + $0x88] sm:$0xff]
    %v228 = vld [vmem:[#allocation6 + $0x90] sm:$0xff]
    %v229 = vld [vmem:[#allocation6 + $0x98] sm:$0xff]
    %v230 = vld [vmem:[#allocation6 + $0xa0] sm:$0xff]
    %v231 = vld [vmem:[#allocation6 + $0xa8] sm:$0xff]
    %v232 = vld [vmem:[#allocation6 + $0xb0] sm:$0xff]
    %v233 = vld [vmem:[#allocation6 + $0xb8] sm:$0xff]
    %v234 = vld [vmem:[#allocation6 + $0xc0] sm:$0xff]
    %v235 = vld [vmem:[#allocation6 + $0xc8] sm:$0xff]
    %v236 = vld [vmem:[#allocation6 + $0xd0] sm:$0xff]
    %v237 = vld [vmem:[#allocation6 + $0xd8] sm:$0xff]
    %v238 = vld [vmem:[#allocation6 + $0xe0] sm:$0xff]
    %v239 = vld [vmem:[#allocation6 + $0xe8] sm:$0xff]
    %v240 = vld [vmem:[#allocation6 + $0xf0] sm:$0xff]
    %v241 = vld [vmem:[#allocation6 + $0xf8] sm:$0xff]
    %v242 = vld [vmem:[%s4] sm:$0x1]
    %v244 = vlaneseq
    %v245 = vshrl.u32 %v244, 7
    %v246 = vsub.s32 0, %v245
    %v247 = vrot.slane %v242, %v246
    %249 = vmatprep.subr.mxu0 0.0
    %250 = vmatpush1.msra.mxu0 %v225
    %251 = vmatprep.subr.mxu0 0.0
    %252 = vmatpush1.msra.mxu0 %v224
    %253 = vmatprep.subr.mxu0 0.0
    %254 = vmatpush1.msra.mxu0 %v223
    %255 = vmatprep.subr.mxu0 0.0
    %256 = vmatpush1.msra.mxu0 %v222
    %257 = vmatprep.subr.mxu0 0.0
    %258 = vmatpush1.msra.mxu0 %v221
    %259 = vmatprep.subr.mxu0 0.0
    %260 = vmatpush1.msra.mxu0 %v220
    %261 = vmatprep.subr.mxu0 0.0
    %262 = vmatpush1.msra.mxu0 %v219
    %263 = vmatprep.subr.mxu0 0.0
    %264 = vmatpush1.msra.mxu0 %v218
    %265 = vmatprep.subr.mxu0 0.0
    %266 = vmatpush1.msra.mxu0 %v217
    %267 = vmatprep.subr.mxu0 0.0
    %268 = vmatpush1.msra.mxu0 %v216
    %269 = vmatprep.subr.mxu0 0.0
    %270 = vmatpush1.msra.mxu0 %v215
    %271 = vmatprep.subr.mxu0 0.0
    %272 = vmatpush1.msra.mxu0 %v214
    %273 = vmatprep.subr.mxu0 0.0
    %274 = vmatpush1.msra.mxu0 %v213
    %275 = vmatprep.subr.mxu0 0.0
    %276 = vmatpush1.msra.mxu0 %v212
    %277 = vmatprep.subr.mxu0 0.0
    %278 = vmatpush1.msra.mxu0 %v211
    %279 = vmatprep.subr.mxu0 0.0
    %280 = vmatpush1.msra.mxu0 %v210
    %281 = vmatprep.subr.mxu0 0.0
    %282 = vmatpush2.msra.mxu0 %v241
    %283 = vmatprep.subr.mxu0 0.0
    %284 = vmatpush2.msra.mxu0 %v240
    %285 = vmatprep.subr.mxu0 0.0
    %286 = vmatpush2.msra.mxu0 %v239
    %287 = vmatprep.subr.mxu0 0.0
    %288 = vmatpush2.msra.mxu0 %v238
    %289 = vmatprep.subr.mxu0 0.0
    %290 = vmatpush2.msra.mxu0 %v237
    %291 = vmatprep.subr.mxu0 0.0
    %292 = vmatpush2.msra.mxu0 %v236
    %293 = vmatprep.subr.mxu0 0.0
    %294 = vmatpush2.msra.mxu0 %v235
    %295 = vmatprep.subr.mxu0 0.0
    %296 = vmatpush2.msra.mxu0 %v234
    %297 = vmatprep.subr.mxu0 0.0
    %298 = vmatpush2.msra.mxu0 %v233
    %299 = vmatprep.subr.mxu0 0.0
    %300 = vmatpush2.msra.mxu0 %v232
    %301 = vmatprep.subr.mxu0 0.0
    %302 = vmatpush2.msra.mxu0 %v231
    %303 = vmatprep.subr.mxu0 0.0
    %304 = vmatpush2.msra.mxu0 %v230
    %305 = vmatprep.subr.mxu0 0.0
    %306 = vmatpush2.msra.mxu0 %v229
    %307 = vmatprep.subr.mxu0 0.0
    %308 = vmatpush2.msra.mxu0 %v228
    %309 = vmatprep.subr.mxu0 0.0
    %310 = vmatpush2.msra.mxu0 %v227
    %311 = vmatprep.subr.mxu0 0.0
    %312 = vmatpush2.msra.mxu0 %v226
    %313 = vmatprep.mubr.f32.mxu0 %v209
    %314 = vmatmul.mubr.f32.gmra.mxu0 %v208
    %v315 = vpop.f32.mrf.mxu0
    %v316 = vadd.f32 %v247, %v315
    %v317 = vpop.f32.mrf.mxu0
    %318 = vdwg.mxu0
    %v319 = vmax.f32 %v316, 0.0
    %320 = vst [vmem:[#allocation9] sm:$0xff] %v319
    %v321 = vld [vmem:[%s5] sm:$0xff]
    %v322 = vld [vmem:[%s5 + $0x8] sm:$0xff]
    %v323 = vld [vmem:[%s5 + $0x10] sm:$0xff]
    %v324 = vld [vmem:[%s5 + $0x18] sm:$0xff]
    %v325 = vld [vmem:[%s5 + $0x20] sm:$0xff]
    %v326 = vld [vmem:[%s5 + $0x28] sm:$0xff]
    %v327 = vld [vmem:[%s5 + $0x30] sm:$0xff]
    %v328 = vld [vmem:[%s5 + $0x38] sm:$0xff]
    %v329 = vld [vmem:[%s5 + $0x40] sm:$0xff]
    %v330 = vld [vmem:[%s5 + $0x48] sm:$0xff]
    %v331 = vld [vmem:[%s5 + $0x50] sm:$0xff]
    %v332 = vld [vmem:[%s5 + $0x58] sm:$0xff]
    %v333 = vld [vmem:[%s5 + $0x60] sm:$0xff]
    %v334 = vld [vmem:[%s5 + $0x68] sm:$0xff]
    %v335 = vld [vmem:[%s5 + $0x70] sm:$0xff]
    %v336 = vld [vmem:[%s5 + $0x78] sm:$0xff]
    %s337 = sld [smem:[#allocation2]]
    %v338 = vstv %s337
    %339 = vmatprep.subr.mxu0 0.0
    %340 = vmatpush1.msra.mxu0 %v336
    %341 = vmatprep.subr.mxu0 0.0
    %342 = vmatpush1.msra.mxu0 %v335
    %343 = vmatprep.subr.mxu0 0.0
    %344 = vmatpush1.msra.mxu0 %v334
    %345 = vmatprep.subr.mxu0 0.0
    %346 = vmatpush1.msra.mxu0 %v333
    %347 = vmatprep.subr.mxu0 0.0
    %348 = vmatpush1.msra.mxu0 %v332
    %349 = vmatprep.subr.mxu0 0.0
    %350 = vmatpush1.msra.mxu0 %v331
    %351 = vmatprep.subr.mxu0 0.0
    %352 = vmatpush1.msra.mxu0 %v330
    %353 = vmatprep.subr.mxu0 0.0
    %354 = vmatpush1.msra.mxu0 %v329
    %355 = vmatprep.subr.mxu0 0.0
    %356 = vmatpush1.msra.mxu0 %v328
    %357 = vmatprep.subr.mxu0 0.0
    %358 = vmatpush1.msra.mxu0 %v327
    %359 = vmatprep.subr.mxu0 0.0
    %360 = vmatpush1.msra.mxu0 %v326
    %361 = vmatprep.subr.mxu0 0.0
    %362 = vmatpush1.msra.mxu0 %v325
    %363 = vmatprep.subr.mxu0 0.0
    %364 = vmatpush1.msra.mxu0 %v324
    %365 = vmatprep.subr.mxu0 0.0
    %366 = vmatpush1.msra.mxu0 %v323
    %367 = vmatprep.subr.mxu0 0.0
    %368 = vmatpush1.msra.mxu0 %v322
    %369 = vmatprep.subr.mxu0 0.0
    %370 = vmatpush1.msra.mxu0 %v321
    %371 = vmatprep.subr.mxu0 0.0
    %372 = vmatpush2.msra.mxu0 0.0
    %373 = vmatprep.subr.mxu0 0.0
    %374 = vmatpush2.msra.mxu0 0.0
    %375 = vmatprep.subr.mxu0 0.0
    %376 = vmatpush2.msra.mxu0 0.0
    %377 = vmatprep.subr.mxu0 0.0
    %378 = vmatpush2.msra.mxu0 0.0
    %379 = vmatprep.subr.mxu0 0.0
    %380 = vmatpush2.msra.mxu0 0.0
    %381 = vmatprep.subr.mxu0 0.0
    %382 = vmatpush2.msra.mxu0 0.0
    %383 = vmatprep.subr.mxu0 0.0
    %384 = vmatpush2.msra.mxu0 0.0
    %385 = vmatprep.subr.mxu0 0.0
    %386 = vmatpush2.msra.mxu0 0.0
    %387 = vmatprep.subr.mxu0 0.0
    %388 = vmatpush2.msra.mxu0 0.0
    %389 = vmatprep.subr.mxu0 0.0
    %390 = vmatpush2.msra.mxu0 0.0
    %391 = vmatprep.subr.mxu0 0.0
    %392 = vmatpush2.msra.mxu0 0.0
    %393 = vmatprep.subr.mxu0 0.0
    %394 = vmatpush2.msra.mxu0 0.0
    %395 = vmatprep.subr.mxu0 0.0
    %396 = vmatpush2.msra.mxu0 0.0
    %397 = vmatprep.subr.mxu0 0.0
    %398 = vmatpush2.msra.mxu0 0.0
    %399 = vmatprep.subr.mxu0 0.0
    %400 = vmatpush2.msra.mxu0 0.0
    %401 = vmatprep.subr.mxu0 0.0
    %402 = vmatpush2.msra.mxu0 0.0
    %403 = vmatprep.mubr.f32.mxu0 0.0
    %404 = vmatmul.mubr.f32.gmra.mxu0 %v319
    %v405 = vpop.f32.mrf.mxu0
    %v406 = vadd.f32 %v338, %v405
    %v407 = vpop.f32.mrf.mxu0
    %408 = vdwg.mxu0
    %vm409 = vcmask 64512
    %410 = vst.msk [vmem:[#allocation8] sm:$0xff] %vm409, %v406
    // Predicated region
    $region38: #{tpu_custom_call.1} parent=1 // pred_check
      _
    $region39: #{tpu_custom_call.1} parent=1 // pred_check_branch
      %412 = sbr.rel (0) target = $region41
    $region40: #{tpu_custom_call.1} parent=1 // pred_region
      %s414 = ssub.s32 128, 128
      %415 = vsyncadd [#allocation5], %s414
      %s417 = sshll.u32 [#allocation8], 4
      %s418 = int_to_ptr.vmem [resolvable:$true] %s417
      %420 = dma.vmem_to_hbm [thread:$0]  %s418, 128, %s7, [#allocation5]
    $region41: #{tpu_custom_call.1} parent=1 // pred_fallthru
      _
    // Predicated region
    $region42: #{tpu_custom_call.1} parent=1 // pred_check
      _
    $region43: #{tpu_custom_call.1} parent=1 // pred_check_branch
      %422 = sbr.rel (0) target = $region45
    $region44: #{tpu_custom_call.1} parent=1 // pred_region
      %s424 = ssub.s32 128, 128
      %425 = vsyncadd [#allocation10], %s424
      %s427 = sshll.u32 [#allocation9], 4
      %s428 = int_to_ptr.vmem [resolvable:$true] %s427
      %430 = dma.vmem_to_hbm [thread:$0]  %s428, 128, %s8, [#allocation10]
    $region45: #{tpu_custom_call.1} parent=1 // pred_fallthru
      _
    // Predicated region
    $region46: #{tpu_custom_call.1} parent=1 // pred_check
      _
    $region47: #{tpu_custom_call.1} parent=1 // pred_check_branch
      %432 = sbr.rel (0) target = $region49
    $region48: #{tpu_custom_call.1} parent=1 // pred_region
      %433 = dma.done [#allocation5], 128
    $region49: #{tpu_custom_call.1} parent=1 // pred_fallthru
      _
    // Predicated region
    $region50: #{tpu_custom_call.1} parent=1 // pred_check
      _
    $region51: #{tpu_custom_call.1} parent=1 // pred_check_branch
      %435 = sbr.rel (0) target = $region53
    $region52: #{tpu_custom_call.1} parent=1 // pred_region
      %436 = dma.done [#allocation10], 128
    $region53: #{tpu_custom_call.1} parent=1 // pred_fallthru
      _
    %437 = vsyncpa [#allocation4], 1
    %438 = vsyncpa [#allocation7], 1
    %439 = vsyncpa [#allocation5], 1
    %440 = vsyncpa [#allocation10], 1

</llo_original>
